<compile_context>
chip_gen: v6e
topology: v6e:2x2x1
jax: 0.10.0
libtpu: 0.0.40
codegen_flags: <defaults>
</compile_context>

<pallas_src>
import jax
import jax.numpy as jnp
from jax import lax
from jax.experimental import pallas as pl
from jax.experimental.pallas import tpu as pltpu


def _round_up(x, m):
    return ((x + m - 1) // m) * m


def _embed_gather_kernel(ids_ref, table_ref, out_ref, sem):
    # ids_ref   : SMEM (scalar prefetch), (chunk_tokens,) int32 token ids
    # table_ref : HBM (pl.ANY), (vocab, d_model_p) embedding table
    # out_ref   : VMEM, (tile_rows, d_model_p) output tile for this grid step
    # sem       : scalar DMA semaphore
    tile_rows = out_ref.shape[0]
    base = pl.multiple_of(pl.program_id(0) * tile_rows, tile_rows)

    # Issue all row gathers for this tile; they are all in flight at once.
    def _start(i, carry):
        tok = ids_ref[base + i]                      # scalar SMEM read
        pltpu.make_async_copy(table_ref.at[tok], out_ref.at[i], sem).start()
        return carry

    lax.fori_loop(0, tile_rows, _start, 0, unroll=16)

    # Single aggregated drain: DMA semaphores count bytes, so one wait whose
    # descriptor covers the full (tile_rows, d_model_p) tile retires all
    # tile_rows row copies at once (the src/dst refs here only determine the
    # byte count; no copy is issued by .wait()).
    pltpu.make_async_copy(out_ref, out_ref, sem).wait()


def _gather_chunk(ids_chunk, table, tile_rows):
    """One pallas_call over a tile-aligned chunk of flattened token ids."""
    (chunk_tokens,) = ids_chunk.shape
    _, d_model_p = table.shape
    num_tiles = chunk_tokens // tile_rows

    grid_spec = pltpu.PrefetchScalarGridSpec(
        num_scalar_prefetch=1,                        # ids -> SMEM
        grid=(num_tiles,),
        in_specs=[
            pl.BlockSpec(memory_space=pl.ANY),        # table stays in HBM
        ],
        out_specs=pl.BlockSpec((tile_rows, d_model_p), lambda i, ids: (i, 0)),
        scratch_shapes=[pltpu.SemaphoreType.DMA(())],
    )

    return pl.pallas_call(
        _embed_gather_kernel,
        out_shape=jax.ShapeDtypeStruct((chunk_tokens, d_model_p), table.dtype),
        grid_spec=grid_spec,
        compiler_params=pltpu.CompilerParams(
            dimension_semantics=("parallel",),        # shards over TCs on v7x
        ),
    )(ids_chunk, table)


def embedder_forward(x_ids, embed_table, *, tile_rows=256, table_dtype=None,
                     max_chunk_tokens=32768,
                     vmem_budget_bytes=8 * 1024 * 1024):
    """Pallas equivalent of Embedder.forward.

    x_ids:       int (batch, seq) token ids
    embed_table: (vocab_size, d_model) embedding table
    table_dtype: optional serving dtype for the table (e.g. jnp.bfloat16);
                 halves HBM gather traffic but drops f32 bit-exactness.
    returns:     (batch, seq, d_model) gathered embeddings
    """
    batch, seq = x_ids.shape
    vocab, d_model = embed_table.shape
    T = batch * seq

    table = embed_table
    if table_dtype is not None and table_dtype != table.dtype:
        table = table.astype(table_dtype)             # bf16 serving path
    dtype_bytes = jnp.dtype(table.dtype).itemsize

    # Lane-dense rows: pad d_model to a multiple of 128 once (sliced off at
    # the end) so every row DMA and the out-tile writeback are unmasked.
    d_model_p = _round_up(d_model, 128)
    if d_model_p != d_model:
        table = jnp.pad(table, ((0, 0), (0, d_model_p - d_model)))

    # Clamp ids so a bad token can never gather out-of-bounds HBM rows (TPU
    # DMAs are not runtime bounds-checked).  torch would raise instead.
    ids_flat = jnp.clip(x_ids.reshape(T).astype(jnp.int32), 0, vocab - 1)

    # VMEM-budgeted tile size: the out tile is double-buffered by the
    # pipeline, so require 2 * tile_rows * row_bytes <= budget.
    row_bytes = d_model_p * dtype_bytes
    budget_rows = max(8, vmem_budget_bytes // (2 * row_bytes))
    tile_rows = min(tile_rows, budget_rows, _round_up(T, 8))
    tile_rows = max(8, (tile_rows // 8) * 8)

    num_tiles = -(-T // tile_rows)
    T_pad = num_tiles * tile_rows
    if T_pad != T:
        ids_flat = jnp.pad(ids_flat, (0, T_pad - T))  # pad ids gather row 0

    # Chunk the outer call so the scalar-prefetched 1-D ids (SMEM pads them
    # to next_pow2(4*chunk) bytes) stay small for prefill-sized token counts.
    chunk_tokens = max(tile_rows, (max_chunk_tokens // tile_rows) * tile_rows)
    outs = []
    for start in range(0, T_pad, chunk_tokens):
        stop = min(start + chunk_tokens, T_pad)
        outs.append(_gather_chunk(ids_flat[start:stop], table, tile_rows))
    out_flat = outs[0] if len(outs) == 1 else jnp.concatenate(outs, axis=0)

    return out_flat[:T, :d_model].reshape(batch, seq, d_model)


if __name__ == "__main__":
    # Small, forward-consistent shapes.
    vocab_size = 64
    d_model = 128
    batch, seq = 2, 8

    key = jax.random.PRNGKey(0)
    k_tab, k_ids = jax.random.split(key)

    # nn.Embedding default init: weight ~ N(0, 1)
    embed_table = jax.random.normal(k_tab, (vocab_size, d_model), dtype=jnp.float32)
    x_ids = jax.random.randint(k_ids, (batch, seq), 0, vocab_size, dtype=jnp.int32)

    out = embedder_forward(x_ids, embed_table)
    out = jax.block_until_ready(out)

    # Reference: plain gather (exact match expected — pure f32 row copy).
    ref = embed_table[x_ids]
    assert out.shape == (batch, seq, d_model)
    assert jnp.array_equal(out, ref), "Pallas embedding lookup mismatch"

    print("KERNEL_OK")
</pallas_src>

<mosaic_0001>
module attributes {stable_mosaic.version = 11 : i64} {
  func.func @_embed_gather_kernel(%arg0: i32, %arg1: memref<16xi32, #tpu.memory_space<smem>>, %arg2: memref<64x128xf32, #tpu.memory_space<any>>, %arg3: memref<16x128xf32, #tpu.memory_space<vmem>>, %arg4: memref<!tpu.dma_semaphore, #tpu.memory_space<semaphore_mem>>) attributes {dimension_semantics = [#tpu.dimension_semantics<parallel>], iteration_bounds = array<i64: 1>, scalar_prefetch = 1 : i64, scratch_operands = 1 : i64, tpu.core_type = #tpu.core_type<tc>, window_params = [{}, {transform_indices = @transform_1, window_bounds = array<i64: 16, 128>}]} {
    %c16_i32 = arith.constant 16 : i32
    %0 = arith.muli %arg0, %c16_i32 : i32
    %1 = tpu.assume_multiple %0, 16 : i32
    %c0_i32 = arith.constant 0 : i32
    %2 = arith.addi %1, %c0_i32 : i32
    %3 = arith.index_cast %2 : i32 to index
    %4 = memref.load %arg1[%3] : memref<16xi32, #tpu.memory_space<smem>>
    %c0_i32_0 = arith.constant 0 : i32
    %5 = tpu.memref_slice %arg2[%4, %c0_i32_0] : memref<64x128xf32, #tpu.memory_space<any>> -> memref<1x128xf32, #tpu.memory_space<any>>
    %6 = tpu.memref_squeeze %5 : memref<1x128xf32, #tpu.memory_space<any>> -> memref<128xf32, #tpu.memory_space<any>>
    %c0_i32_1 = arith.constant 0 : i32
    %7 = tpu.memref_slice %arg3[%c0_i32, %c0_i32_1] : memref<16x128xf32, #tpu.memory_space<vmem>> -> memref<1x128xf32, #tpu.memory_space<vmem>>
    %8 = tpu.memref_squeeze %7 : memref<1x128xf32, #tpu.memory_space<vmem>> -> memref<128xf32, #tpu.memory_space<vmem>>
    tpu.enqueue_dma source(%6 : memref<128xf32, #tpu.memory_space<any>>) target(%8 : memref<128xf32, #tpu.memory_space<vmem>>) target_semaphore(%arg4 : memref<!tpu.dma_semaphore, #tpu.memory_space<semaphore_mem>>)
    %c1_i32 = arith.constant 1 : i32
    %9 = arith.addi %1, %c1_i32 : i32
    %10 = arith.index_cast %9 : i32 to index
    %11 = memref.load %arg1[%10] : memref<16xi32, #tpu.memory_space<smem>>
    %c0_i32_2 = arith.constant 0 : i32
    %12 = tpu.memref_slice %arg2[%11, %c0_i32_2] : memref<64x128xf32, #tpu.memory_space<any>> -> memref<1x128xf32, #tpu.memory_space<any>>
    %13 = tpu.memref_squeeze %12 : memref<1x128xf32, #tpu.memory_space<any>> -> memref<128xf32, #tpu.memory_space<any>>
    %c0_i32_3 = arith.constant 0 : i32
    %14 = tpu.memref_slice %arg3[%c1_i32, %c0_i32_3] : memref<16x128xf32, #tpu.memory_space<vmem>> -> memref<1x128xf32, #tpu.memory_space<vmem>>
    %15 = tpu.memref_squeeze %14 : memref<1x128xf32, #tpu.memory_space<vmem>> -> memref<128xf32, #tpu.memory_space<vmem>>
    tpu.enqueue_dma source(%13 : memref<128xf32, #tpu.memory_space<any>>) target(%15 : memref<128xf32, #tpu.memory_space<vmem>>) target_semaphore(%arg4 : memref<!tpu.dma_semaphore, #tpu.memory_space<semaphore_mem>>)
    %c2_i32 = arith.constant 2 : i32
    %16 = arith.addi %1, %c2_i32 : i32
    %17 = arith.index_cast %16 : i32 to index
    %18 = memref.load %arg1[%17] : memref<16xi32, #tpu.memory_space<smem>>
    %c0_i32_4 = arith.constant 0 : i32
    %19 = tpu.memref_slice %arg2[%18, %c0_i32_4] : memref<64x128xf32, #tpu.memory_space<any>> -> memref<1x128xf32, #tpu.memory_space<any>>
    %20 = tpu.memref_squeeze %19 : memref<1x128xf32, #tpu.memory_space<any>> -> memref<128xf32, #tpu.memory_space<any>>
    %c0_i32_5 = arith.constant 0 : i32
    %21 = tpu.memref_slice %arg3[%c2_i32, %c0_i32_5] : memref<16x128xf32, #tpu.memory_space<vmem>> -> memref<1x128xf32, #tpu.memory_space<vmem>>
    %22 = tpu.memref_squeeze %21 : memref<1x128xf32, #tpu.memory_space<vmem>> -> memref<128xf32, #tpu.memory_space<vmem>>
    tpu.enqueue_dma source(%20 : memref<128xf32, #tpu.memory_space<any>>) target(%22 : memref<128xf32, #tpu.memory_space<vmem>>) target_semaphore(%arg4 : memref<!tpu.dma_semaphore, #tpu.memory_space<semaphore_mem>>)
    %c3_i32 = arith.constant 3 : i32
    %23 = arith.addi %1, %c3_i32 : i32
    %24 = arith.index_cast %23 : i32 to index
    %25 = memref.load %arg1[%24] : memref<16xi32, #tpu.memory_space<smem>>
    %c0_i32_6 = arith.constant 0 : i32
    %26 = tpu.memref_slice %arg2[%25, %c0_i32_6] : memref<64x128xf32, #tpu.memory_space<any>> -> memref<1x128xf32, #tpu.memory_space<any>>
    %27 = tpu.memref_squeeze %26 : memref<1x128xf32, #tpu.memory_space<any>> -> memref<128xf32, #tpu.memory_space<any>>
    %c0_i32_7 = arith.constant 0 : i32
    %28 = tpu.memref_slice %arg3[%c3_i32, %c0_i32_7] : memref<16x128xf32, #tpu.memory_space<vmem>> -> memref<1x128xf32, #tpu.memory_space<vmem>>
    %29 = tpu.memref_squeeze %28 : memref<1x128xf32, #tpu.memory_space<vmem>> -> memref<128xf32, #tpu.memory_space<vmem>>
    tpu.enqueue_dma source(%27 : memref<128xf32, #tpu.memory_space<any>>) target(%29 : memref<128xf32, #tpu.memory_space<vmem>>) target_semaphore(%arg4 : memref<!tpu.dma_semaphore, #tpu.memory_space<semaphore_mem>>)
    %c4_i32 = arith.constant 4 : i32
    %30 = arith.addi %1, %c4_i32 : i32
    %31 = arith.index_cast %30 : i32 to index
    %32 = memref.load %arg1[%31] : memref<16xi32, #tpu.memory_space<smem>>
    %c0_i32_8 = arith.constant 0 : i32
    %33 = tpu.memref_slice %arg2[%32, %c0_i32_8] : memref<64x128xf32, #tpu.memory_space<any>> -> memref<1x128xf32, #tpu.memory_space<any>>
    %34 = tpu.memref_squeeze %33 : memref<1x128xf32, #tpu.memory_space<any>> -> memref<128xf32, #tpu.memory_space<any>>
    %c0_i32_9 = arith.constant 0 : i32
    %35 = tpu.memref_slice %arg3[%c4_i32, %c0_i32_9] : memref<16x128xf32, #tpu.memory_space<vmem>> -> memref<1x128xf32, #tpu.memory_space<vmem>>
    %36 = tpu.memref_squeeze %35 : memref<1x128xf32, #tpu.memory_space<vmem>> -> memref<128xf32, #tpu.memory_space<vmem>>
    tpu.enqueue_dma source(%34 : memref<128xf32, #tpu.memory_space<any>>) target(%36 : memref<128xf32, #tpu.memory_space<vmem>>) target_semaphore(%arg4 : memref<!tpu.dma_semaphore, #tpu.memory_space<semaphore_mem>>)
    %c5_i32 = arith.constant 5 : i32
    %37 = arith.addi %1, %c5_i32 : i32
    %38 = arith.index_cast %37 : i32 to index
    %39 = memref.load %arg1[%38] : memref<16xi32, #tpu.memory_space<smem>>
    %c0_i32_10 = arith.constant 0 : i32
    %40 = tpu.memref_slice %arg2[%39, %c0_i32_10] : memref<64x128xf32, #tpu.memory_space<any>> -> memref<1x128xf32, #tpu.memory_space<any>>
    %41 = tpu.memref_squeeze %40 : memref<1x128xf32, #tpu.memory_space<any>> -> memref<128xf32, #tpu.memory_space<any>>
    %c0_i32_11 = arith.constant 0 : i32
    %42 = tpu.memref_slice %arg3[%c5_i32, %c0_i32_11] : memref<16x128xf32, #tpu.memory_space<vmem>> -> memref<1x128xf32, #tpu.memory_space<vmem>>
    %43 = tpu.memref_squeeze %42 : memref<1x128xf32, #tpu.memory_space<vmem>> -> memref<128xf32, #tpu.memory_space<vmem>>
    tpu.enqueue_dma source(%41 : memref<128xf32, #tpu.memory_space<any>>) target(%43 : memref<128xf32, #tpu.memory_space<vmem>>) target_semaphore(%arg4 : memref<!tpu.dma_semaphore, #tpu.memory_space<semaphore_mem>>)
    %c6_i32 = arith.constant 6 : i32
    %44 = arith.addi %1, %c6_i32 : i32
    %45 = arith.index_cast %44 : i32 to index
    %46 = memref.load %arg1[%45] : memref<16xi32, #tpu.memory_space<smem>>
    %c0_i32_12 = arith.constant 0 : i32
    %47 = tpu.memref_slice %arg2[%46, %c0_i32_12] : memref<64x128xf32, #tpu.memory_space<any>> -> memref<1x128xf32, #tpu.memory_space<any>>
    %48 = tpu.memref_squeeze %47 : memref<1x128xf32, #tpu.memory_space<any>> -> memref<128xf32, #tpu.memory_space<any>>
    %c0_i32_13 = arith.constant 0 : i32
    %49 = tpu.memref_slice %arg3[%c6_i32, %c0_i32_13] : memref<16x128xf32, #tpu.memory_space<vmem>> -> memref<1x128xf32, #tpu.memory_space<vmem>>
    %50 = tpu.memref_squeeze %49 : memref<1x128xf32, #tpu.memory_space<vmem>> -> memref<128xf32, #tpu.memory_space<vmem>>
    tpu.enqueue_dma source(%48 : memref<128xf32, #tpu.memory_space<any>>) target(%50 : memref<128xf32, #tpu.memory_space<vmem>>) target_semaphore(%arg4 : memref<!tpu.dma_semaphore, #tpu.memory_space<semaphore_mem>>)
    %c7_i32 = arith.constant 7 : i32
    %51 = arith.addi %1, %c7_i32 : i32
    %52 = arith.index_cast %51 : i32 to index
    %53 = memref.load %arg1[%52] : memref<16xi32, #tpu.memory_space<smem>>
    %c0_i32_14 = arith.constant 0 : i32
    %54 = tpu.memref_slice %arg2[%53, %c0_i32_14] : memref<64x128xf32, #tpu.memory_space<any>> -> memref<1x128xf32, #tpu.memory_space<any>>
    %55 = tpu.memref_squeeze %54 : memref<1x128xf32, #tpu.memory_space<any>> -> memref<128xf32, #tpu.memory_space<any>>
    %c0_i32_15 = arith.constant 0 : i32
    %56 = tpu.memref_slice %arg3[%c7_i32, %c0_i32_15] : memref<16x128xf32, #tpu.memory_space<vmem>> -> memref<1x128xf32, #tpu.memory_space<vmem>>
    %57 = tpu.memref_squeeze %56 : memref<1x128xf32, #tpu.memory_space<vmem>> -> memref<128xf32, #tpu.memory_space<vmem>>
    tpu.enqueue_dma source(%55 : memref<128xf32, #tpu.memory_space<any>>) target(%57 : memref<128xf32, #tpu.memory_space<vmem>>) target_semaphore(%arg4 : memref<!tpu.dma_semaphore, #tpu.memory_space<semaphore_mem>>)
    %c8_i32 = arith.constant 8 : i32
    %58 = arith.addi %1, %c8_i32 : i32
    %59 = arith.index_cast %58 : i32 to index
    %60 = memref.load %arg1[%59] : memref<16xi32, #tpu.memory_space<smem>>
    %c0_i32_16 = arith.constant 0 : i32
    %61 = tpu.memref_slice %arg2[%60, %c0_i32_16] : memref<64x128xf32, #tpu.memory_space<any>> -> memref<1x128xf32, #tpu.memory_space<any>>
    %62 = tpu.memref_squeeze %61 : memref<1x128xf32, #tpu.memory_space<any>> -> memref<128xf32, #tpu.memory_space<any>>
    %c0_i32_17 = arith.constant 0 : i32
    %63 = tpu.memref_slice %arg3[%c8_i32, %c0_i32_17] : memref<16x128xf32, #tpu.memory_space<vmem>> -> memref<1x128xf32, #tpu.memory_space<vmem>>
    %64 = tpu.memref_squeeze %63 : memref<1x128xf32, #tpu.memory_space<vmem>> -> memref<128xf32, #tpu.memory_space<vmem>>
    tpu.enqueue_dma source(%62 : memref<128xf32, #tpu.memory_space<any>>) target(%64 : memref<128xf32, #tpu.memory_space<vmem>>) target_semaphore(%arg4 : memref<!tpu.dma_semaphore, #tpu.memory_space<semaphore_mem>>)
    %c9_i32 = arith.constant 9 : i32
    %65 = arith.addi %1, %c9_i32 : i32
    %66 = arith.index_cast %65 : i32 to index
    %67 = memref.load %arg1[%66] : memref<16xi32, #tpu.memory_space<smem>>
    %c0_i32_18 = arith.constant 0 : i32
    %68 = tpu.memref_slice %arg2[%67, %c0_i32_18] : memref<64x128xf32, #tpu.memory_space<any>> -> memref<1x128xf32, #tpu.memory_space<any>>
    %69 = tpu.memref_squeeze %68 : memref<1x128xf32, #tpu.memory_space<any>> -> memref<128xf32, #tpu.memory_space<any>>
    %c0_i32_19 = arith.constant 0 : i32
    %70 = tpu.memref_slice %arg3[%c9_i32, %c0_i32_19] : memref<16x128xf32, #tpu.memory_space<vmem>> -> memref<1x128xf32, #tpu.memory_space<vmem>>
    %71 = tpu.memref_squeeze %70 : memref<1x128xf32, #tpu.memory_space<vmem>> -> memref<128xf32, #tpu.memory_space<vmem>>
    tpu.enqueue_dma source(%69 : memref<128xf32, #tpu.memory_space<any>>) target(%71 : memref<128xf32, #tpu.memory_space<vmem>>) target_semaphore(%arg4 : memref<!tpu.dma_semaphore, #tpu.memory_space<semaphore_mem>>)
    %c10_i32 = arith.constant 10 : i32
    %72 = arith.addi %1, %c10_i32 : i32
    %73 = arith.index_cast %72 : i32 to index
    %74 = memref.load %arg1[%73] : memref<16xi32, #tpu.memory_space<smem>>
    %c0_i32_20 = arith.constant 0 : i32
    %75 = tpu.memref_slice %arg2[%74, %c0_i32_20] : memref<64x128xf32, #tpu.memory_space<any>> -> memref<1x128xf32, #tpu.memory_space<any>>
    %76 = tpu.memref_squeeze %75 : memref<1x128xf32, #tpu.memory_space<any>> -> memref<128xf32, #tpu.memory_space<any>>
    %c0_i32_21 = arith.constant 0 : i32
    %77 = tpu.memref_slice %arg3[%c10_i32, %c0_i32_21] : memref<16x128xf32, #tpu.memory_space<vmem>> -> memref<1x128xf32, #tpu.memory_space<vmem>>
    %78 = tpu.memref_squeeze %77 : memref<1x128xf32, #tpu.memory_space<vmem>> -> memref<128xf32, #tpu.memory_space<vmem>>
    tpu.enqueue_dma source(%76 : memref<128xf32, #tpu.memory_space<any>>) target(%78 : memref<128xf32, #tpu.memory_space<vmem>>) target_semaphore(%arg4 : memref<!tpu.dma_semaphore, #tpu.memory_space<semaphore_mem>>)
    %c11_i32 = arith.constant 11 : i32
    %79 = arith.addi %1, %c11_i32 : i32
    %80 = arith.index_cast %79 : i32 to index
    %81 = memref.load %arg1[%80] : memref<16xi32, #tpu.memory_space<smem>>
    %c0_i32_22 = arith.constant 0 : i32
    %82 = tpu.memref_slice %arg2[%81, %c0_i32_22] : memref<64x128xf32, #tpu.memory_space<any>> -> memref<1x128xf32, #tpu.memory_space<any>>
    %83 = tpu.memref_squeeze %82 : memref<1x128xf32, #tpu.memory_space<any>> -> memref<128xf32, #tpu.memory_space<any>>
    %c0_i32_23 = arith.constant 0 : i32
    %84 = tpu.memref_slice %arg3[%c11_i32, %c0_i32_23] : memref<16x128xf32, #tpu.memory_space<vmem>> -> memref<1x128xf32, #tpu.memory_space<vmem>>
    %85 = tpu.memref_squeeze %84 : memref<1x128xf32, #tpu.memory_space<vmem>> -> memref<128xf32, #tpu.memory_space<vmem>>
    tpu.enqueue_dma source(%83 : memref<128xf32, #tpu.memory_space<any>>) target(%85 : memref<128xf32, #tpu.memory_space<vmem>>) target_semaphore(%arg4 : memref<!tpu.dma_semaphore, #tpu.memory_space<semaphore_mem>>)
    %c12_i32 = arith.constant 12 : i32
    %86 = arith.addi %1, %c12_i32 : i32
    %87 = arith.index_cast %86 : i32 to index
    %88 = memref.load %arg1[%87] : memref<16xi32, #tpu.memory_space<smem>>
    %c0_i32_24 = arith.constant 0 : i32
    %89 = tpu.memref_slice %arg2[%88, %c0_i32_24] : memref<64x128xf32, #tpu.memory_space<any>> -> memref<1x128xf32, #tpu.memory_space<any>>
    %90 = tpu.memref_squeeze %89 : memref<1x128xf32, #tpu.memory_space<any>> -> memref<128xf32, #tpu.memory_space<any>>
    %c0_i32_25 = arith.constant 0 : i32
    %91 = tpu.memref_slice %arg3[%c12_i32, %c0_i32_25] : memref<16x128xf32, #tpu.memory_space<vmem>> -> memref<1x128xf32, #tpu.memory_space<vmem>>
    %92 = tpu.memref_squeeze %91 : memref<1x128xf32, #tpu.memory_space<vmem>> -> memref<128xf32, #tpu.memory_space<vmem>>
    tpu.enqueue_dma source(%90 : memref<128xf32, #tpu.memory_space<any>>) target(%92 : memref<128xf32, #tpu.memory_space<vmem>>) target_semaphore(%arg4 : memref<!tpu.dma_semaphore, #tpu.memory_space<semaphore_mem>>)
    %c13_i32 = arith.constant 13 : i32
    %93 = arith.addi %1, %c13_i32 : i32
    %94 = arith.index_cast %93 : i32 to index
    %95 = memref.load %arg1[%94] : memref<16xi32, #tpu.memory_space<smem>>
    %c0_i32_26 = arith.constant 0 : i32
    %96 = tpu.memref_slice %arg2[%95, %c0_i32_26] : memref<64x128xf32, #tpu.memory_space<any>> -> memref<1x128xf32, #tpu.memory_space<any>>
    %97 = tpu.memref_squeeze %96 : memref<1x128xf32, #tpu.memory_space<any>> -> memref<128xf32, #tpu.memory_space<any>>
    %c0_i32_27 = arith.constant 0 : i32
    %98 = tpu.memref_slice %arg3[%c13_i32, %c0_i32_27] : memref<16x128xf32, #tpu.memory_space<vmem>> -> memref<1x128xf32, #tpu.memory_space<vmem>>
    %99 = tpu.memref_squeeze %98 : memref<1x128xf32, #tpu.memory_space<vmem>> -> memref<128xf32, #tpu.memory_space<vmem>>
    tpu.enqueue_dma source(%97 : memref<128xf32, #tpu.memory_space<any>>) target(%99 : memref<128xf32, #tpu.memory_space<vmem>>) target_semaphore(%arg4 : memref<!tpu.dma_semaphore, #tpu.memory_space<semaphore_mem>>)
    %c14_i32 = arith.constant 14 : i32
    %100 = arith.addi %1, %c14_i32 : i32
    %101 = arith.index_cast %100 : i32 to index
    %102 = memref.load %arg1[%101] : memref<16xi32, #tpu.memory_space<smem>>
    %c0_i32_28 = arith.constant 0 : i32
    %103 = tpu.memref_slice %arg2[%102, %c0_i32_28] : memref<64x128xf32, #tpu.memory_space<any>> -> memref<1x128xf32, #tpu.memory_space<any>>
    %104 = tpu.memref_squeeze %103 : memref<1x128xf32, #tpu.memory_space<any>> -> memref<128xf32, #tpu.memory_space<any>>
    %c0_i32_29 = arith.constant 0 : i32
    %105 = tpu.memref_slice %arg3[%c14_i32, %c0_i32_29] : memref<16x128xf32, #tpu.memory_space<vmem>> -> memref<1x128xf32, #tpu.memory_space<vmem>>
    %106 = tpu.memref_squeeze %105 : memref<1x128xf32, #tpu.memory_space<vmem>> -> memref<128xf32, #tpu.memory_space<vmem>>
    tpu.enqueue_dma source(%104 : memref<128xf32, #tpu.memory_space<any>>) target(%106 : memref<128xf32, #tpu.memory_space<vmem>>) target_semaphore(%arg4 : memref<!tpu.dma_semaphore, #tpu.memory_space<semaphore_mem>>)
    %c15_i32 = arith.constant 15 : i32
    %107 = arith.addi %1, %c15_i32 : i32
    %108 = arith.index_cast %107 : i32 to index
    %109 = memref.load %arg1[%108] : memref<16xi32, #tpu.memory_space<smem>>
    %c0_i32_30 = arith.constant 0 : i32
    %110 = tpu.memref_slice %arg2[%109, %c0_i32_30] : memref<64x128xf32, #tpu.memory_space<any>> -> memref<1x128xf32, #tpu.memory_space<any>>
    %111 = tpu.memref_squeeze %110 : memref<1x128xf32, #tpu.memory_space<any>> -> memref<128xf32, #tpu.memory_space<any>>
    %c0_i32_31 = arith.constant 0 : i32
    %112 = tpu.memref_slice %arg3[%c15_i32, %c0_i32_31] : memref<16x128xf32, #tpu.memory_space<vmem>> -> memref<1x128xf32, #tpu.memory_space<vmem>>
    %113 = tpu.memref_squeeze %112 : memref<1x128xf32, #tpu.memory_space<vmem>> -> memref<128xf32, #tpu.memory_space<vmem>>
    tpu.enqueue_dma source(%111 : memref<128xf32, #tpu.memory_space<any>>) target(%113 : memref<128xf32, #tpu.memory_space<vmem>>) target_semaphore(%arg4 : memref<!tpu.dma_semaphore, #tpu.memory_space<semaphore_mem>>)
    %c16_i32_32 = arith.constant 16 : i32
    tpu.wait_dma2 semaphore(%arg4 : memref<!tpu.dma_semaphore, #tpu.memory_space<semaphore_mem>>) src(%arg3 : memref<16x128xf32, #tpu.memory_space<vmem>>) dst(%arg3 : memref<16x128xf32, #tpu.memory_space<vmem>>)
    return
  }
  func.func @transform_1(%arg0: i32, %arg1: memref<16xi32, #tpu.memory_space<smem>>) -> (i32, i32) {
    %c0_i32 = arith.constant 0 : i32
    %c0_i32_0 = arith.constant 0 : i32
    return %arg0, %c0_i32 : i32, i32
  }
}

</mosaic_0001>

<llo_original>
// kernel: tpu_custom_call.1
$region0: #{tpu_custom_call.1}
  #allocation0 [shape = 'u32[]', space=smem, size = 0x4, offset = 0x4, fixed_abs, tag = 'smem constant byte address 0x4 - core index']
  #allocation1 [shape = 'u32[144,128]{1,0:T(1,128)}', space=vmem, size = 0x12000, scoped, tag = 'internal scratch']
  #allocation2 [shape = 's32[1]{0}', space=sflag, size = 0x4, scoped, tag = 'scratch operand']
  #allocation3 [shape = 's32[1]{0}', space=sflag, size = 0x4, scoped, tag = 'scoped memory for tpu_custom_call.1']
  #allocation4 [shape = 'u8[512]{0}', space=smem, size = 0x200, scoped, tag = 'prefetched SMEM operand 0']
  #allocation7 [shape = 's32[]', space=sflag, size = 0x4, offset = 0, fixed_abs, tag = 'sflag constant byte address 0x0 - dummy sync flag']
  #allocation8 [shape = 's32[]', space=sflag, size = 0x4, offset = 0, fixed_abs, tag = 'sflag constant byte address 0x0 - dummy sync flag']
  #allocation9 [shape = 'u32[]', space=smem, size = 0x4, offset = 0x44, fixed_abs, tag = 'smem constant byte address 0x44 - assertion arg 0']
  #allocation10 [shape = 'u32[]', space=smem, size = 0x4, offset = 0x48, fixed_abs, tag = 'smem constant byte address 0x48 - assertion arg 1']
  #allocation11 [shape = 's32[]', space=sflag, size = 0x4, offset = 0, fixed_abs, tag = 'sflag constant byte address 0x0 - dummy sync flag']
  #allocation12 [shape = 's32[]', space=sflag, size = 0x4, offset = 0, fixed_abs, tag = 'sflag constant byte address 0x0 - dummy sync flag']
  #allocation13 [shape = 's32[]', space=sflag, size = 0x4, offset = 0, fixed_abs, tag = 'sflag constant byte address 0x0 - dummy sync flag']
  #allocation14 [shape = 's32[]', space=sflag, size = 0x4, offset = 0, fixed_abs, tag = 'sflag constant byte address 0x0 - dummy sync flag']
  #allocation15 [shape = 's32[]', space=sflag, size = 0x4, offset = 0, fixed_abs, tag = 'sflag constant byte address 0x0 - dummy sync flag']
  #allocation16 [shape = 's32[]', space=sflag, size = 0x4, offset = 0, fixed_abs, tag = 'sflag constant byte address 0x0 - dummy sync flag']
  #allocation17 [shape = 's32[]', space=sflag, size = 0x4, offset = 0, fixed_abs, tag = 'sflag constant byte address 0x0 - dummy sync flag']
  #allocation18 [shape = 's32[]', space=sflag, size = 0x4, offset = 0, fixed_abs, tag = 'sflag constant byte address 0x0 - dummy sync flag']
  #allocation19 [shape = 's32[]', space=sflag, size = 0x4, offset = 0, fixed_abs, tag = 'sflag constant byte address 0x0 - dummy sync flag']
  #allocation20 [shape = 's32[]', space=sflag, size = 0x4, offset = 0, fixed_abs, tag = 'sflag constant byte address 0x0 - dummy sync flag']
  #allocation21 [shape = 's32[]', space=sflag, size = 0x4, offset = 0, fixed_abs, tag = 'sflag constant byte address 0x0 - dummy sync flag']
  #allocation22 [shape = 's32[]', space=sflag, size = 0x4, offset = 0, fixed_abs, tag = 'sflag constant byte address 0x0 - dummy sync flag']
  #allocation23 [shape = 's32[]', space=sflag, size = 0x4, offset = 0, fixed_abs, tag = 'sflag constant byte address 0x0 - dummy sync flag']
  #allocation24 [shape = 's32[]', space=sflag, size = 0x4, offset = 0, fixed_abs, tag = 'sflag constant byte address 0x0 - dummy sync flag']
  #allocation25 [shape = 's32[]', space=sflag, size = 0x4, offset = 0, fixed_abs, tag = 'sflag constant byte address 0x0 - dummy sync flag']
  #allocation26 [shape = 's32[]', space=sflag, size = 0x4, offset = 0, fixed_abs, tag = 'sflag constant byte address 0x0 - dummy sync flag']
  #allocation27 [shape = 's32[]', space=sflag, size = 0x4, offset = 0, fixed_abs, tag = 'sflag constant byte address 0x0 - dummy sync flag']
  #allocation28 [shape = 's32[]', space=sflag, size = 0x4, offset = 0, fixed_abs, tag = 'sflag constant byte address 0x0 - dummy sync flag']
  #allocation29 [shape = 's32[]', space=sflag, size = 0x4, offset = 0, fixed_abs, tag = 'sflag constant byte address 0x0 - dummy sync flag']
  #allocation30 [shape = 's32[]', space=sflag, size = 0x4, offset = 0, fixed_abs, tag = 'sflag constant byte address 0x0 - dummy sync flag']
  #allocation31 [shape = 's32[]', space=sflag, size = 0x4, offset = 0, fixed_abs, tag = 'sflag constant byte address 0x0 - dummy sync flag']
  #allocation32 [shape = 's32[]', space=sflag, size = 0x4, offset = 0, fixed_abs, tag = 'sflag constant byte address 0x0 - dummy sync flag']
  #allocation33 [shape = 's32[]', space=sflag, size = 0x4, offset = 0, fixed_abs, tag = 'sflag constant byte address 0x0 - dummy sync flag']
  #allocation34 [shape = 's32[]', space=sflag, size = 0x4, offset = 0, fixed_abs, tag = 'sflag constant byte address 0x0 - dummy sync flag']
  #allocation35 [shape = 's32[]', space=sflag, size = 0x4, offset = 0, fixed_abs, tag = 'sflag constant byte address 0x0 - dummy sync flag']
  #allocation36 [shape = 's32[]', space=sflag, size = 0x4, offset = 0, fixed_abs, tag = 'sflag constant byte address 0x0 - dummy sync flag']
  #allocation37 [shape = 's32[]', space=sflag, size = 0x4, offset = 0, fixed_abs, tag = 'sflag constant byte address 0x0 - dummy sync flag']
  #allocation38 [shape = 's32[]', space=sflag, size = 0x4, offset = 0, fixed_abs, tag = 'sflag constant byte address 0x0 - dummy sync flag']
  #allocation39 [shape = 's32[]', space=sflag, size = 0x4, offset = 0, fixed_abs, tag = 'sflag constant byte address 0x0 - dummy sync flag']
  #allocation40 [shape = 's32[]', space=sflag, size = 0x4, offset = 0, fixed_abs, tag = 'sflag constant byte address 0x0 - dummy sync flag']
  %s0 = inlined_call_operand.hbm [shape: s32[16], index: 0, kind: input, shape index: {}]
  %s1 = inlined_call_operand.hbm [shape: f32[64,128], index: 1, kind: input, shape index: {}]
  %s2 = inlined_call_operand.hbm [shape: f32[16,128], index: 2, kind: output, shape index: {}]
  %s3 = sld [smem:[#allocation0]]
  $region74: #{tpu_custom_call.1} parent=0
    _
  %s5 = ssub.s32 1, %s3
  %s6 = scalar_select 0, %s5, %s3
  %8 = dma.hbm_to_smem %s0, 16, [#allocation4], [#allocation3]
  %9 = dma.done [#allocation3], 16
  %10 = sfence
  $region1: #{tpu_custom_call.1} parent=0
    #allocation5 [shape = 'u8[8192]{0}', space=vmem, size = 0x2000, scoped, tag = 'output window, operand 0, single buffered']
    #allocation6 [shape = 's32[1]{0}', space=sflag, size = 0x4, scoped, tag = 'scoped memory for tpu_custom_call.1']
    %11 = vsyncpa [#allocation6], 0
    %s12 = smul.u32 0, 16
    %s13 = sld [smem:[#allocation4 + %s12]]
    %s14 = smul.addr %s13, 16
    %s15 = scalar_lea.hbm %s1, %s14
    // Predicated region
    $region2: #{tpu_custom_call.1} parent=1 // pred_check
      _
    $region3: #{tpu_custom_call.1} parent=1 // pred_check_branch
      %17 = sbr.rel target = $region5
    $region4: #{tpu_custom_call.1} parent=1 // pred_region
      %18 = sst [smem:[#allocation9]] [#allocation8]
      %19 = sst [smem:[#allocation10]] [#allocation7]
    $region5: #{tpu_custom_call.1} parent=1 // pred_fallthru
      _
    %21 = shalt.err (0)
    %s23 = sshll.u32 [#allocation5], 4
    %s24 = int_to_ptr.vmem [resolvable:$true] %s23
    %26 = dma.hbm_to_vmem [thread:$0]  %s15, 16, %s24, [#allocation2]
    %s27 = sadd.s32 %s12, 1
    %s28 = sld [smem:[#allocation4 + %s27]]
    %s29 = smul.addr %s28, 16
    %s30 = scalar_lea.hbm %s1, %s29
    %s31 = scalar_lea.vmem [#allocation5], 1
    // Predicated region
    $region6: #{tpu_custom_call.1} parent=1 // pred_check
      _
    $region7: #{tpu_custom_call.1} parent=1 // pred_check_branch
      %33 = sbr.rel target = $region9
    $region8: #{tpu_custom_call.1} parent=1 // pred_region
      %34 = sst [smem:[#allocation9]] [#allocation12]
      %35 = sst [smem:[#allocation10]] [#allocation11]
    $region9: #{tpu_custom_call.1} parent=1 // pred_fallthru
      _
    %37 = shalt.err (0)
    %s39 = sshll.u32 %s31, 4
    %s40 = int_to_ptr.vmem [resolvable:$true] %s39
    %42 = dma.hbm_to_vmem [thread:$0]  %s30, 16, %s40, [#allocation2]
    %s43 = sadd.s32 %s12, 2
    %s44 = sld [smem:[#allocation4 + %s43]]
    %s45 = smul.addr %s44, 16
    %s46 = scalar_lea.hbm %s1, %s45
    %s47 = scalar_lea.vmem [#allocation5], 2
    // Predicated region
    $region10: #{tpu_custom_call.1} parent=1 // pred_check
      _
    $region11: #{tpu_custom_call.1} parent=1 // pred_check_branch
      %49 = sbr.rel target = $region13
    $region12: #{tpu_custom_call.1} parent=1 // pred_region
      %50 = sst [smem:[#allocation9]] [#allocation14]
      %51 = sst [smem:[#allocation10]] [#allocation13]
    $region13: #{tpu_custom_call.1} parent=1 // pred_fallthru
      _
    %53 = shalt.err (0)
    %s55 = sshll.u32 %s47, 4
    %s56 = int_to_ptr.vmem [resolvable:$true] %s55
    %58 = dma.hbm_to_vmem [thread:$0]  %s46, 16, %s56, [#allocation2]
    %s59 = sadd.s32 %s12, 3
    %s60 = sld [smem:[#allocation4 + %s59]]
    %s61 = smul.addr %s60, 16
    %s62 = scalar_lea.hbm %s1, %s61
    %s63 = scalar_lea.vmem [#allocation5], 3
    // Predicated region
    $region14: #{tpu_custom_call.1} parent=1 // pred_check
      _
    $region15: #{tpu_custom_call.1} parent=1 // pred_check_branch
      %65 = sbr.rel target = $region17
    $region16: #{tpu_custom_call.1} parent=1 // pred_region
      %66 = sst [smem:[#allocation9]] [#allocation16]
      %67 = sst [smem:[#allocation10]] [#allocation15]
    $region17: #{tpu_custom_call.1} parent=1 // pred_fallthru
      _
    %69 = shalt.err (0)
    %s71 = sshll.u32 %s63, 4
    %s72 = int_to_ptr.vmem [resolvable:$true] %s71
    %74 = dma.hbm_to_vmem [thread:$0]  %s62, 16, %s72, [#allocation2]
    %s75 = sadd.s32 %s12, 4
    %s76 = sld [smem:[#allocation4 + %s75]]
    %s77 = smul.addr %s76, 16
    %s78 = scalar_lea.hbm %s1, %s77
    %s79 = scalar_lea.vmem [#allocation5], 4
    // Predicated region
    $region18: #{tpu_custom_call.1} parent=1 // pred_check
      _
    $region19: #{tpu_custom_call.1} parent=1 // pred_check_branch
      %81 = sbr.rel target = $region21
    $region20: #{tpu_custom_call.1} parent=1 // pred_region
      %82 = sst [smem:[#allocation9]] [#allocation18]
      %83 = sst [smem:[#allocation10]] [#allocation17]
    $region21: #{tpu_custom_call.1} parent=1 // pred_fallthru
      _
    %85 = shalt.err (0)
    %s87 = sshll.u32 %s79, 4
    %s88 = int_to_ptr.vmem [resolvable:$true] %s87
    %90 = dma.hbm_to_vmem [thread:$0]  %s78, 16, %s88, [#allocation2]
    %s91 = sadd.s32 %s12, 5
    %s92 = sld [smem:[#allocation4 + %s91]]
    %s93 = smul.addr %s92, 16
    %s94 = scalar_lea.hbm %s1, %s93
    %s95 = scalar_lea.vmem [#allocation5], 5
    // Predicated region
    $region22: #{tpu_custom_call.1} parent=1 // pred_check
      _
    $region23: #{tpu_custom_call.1} parent=1 // pred_check_branch
      %97 = sbr.rel target = $region25
    $region24: #{tpu_custom_call.1} parent=1 // pred_region
      %98 = sst [smem:[#allocation9]] [#allocation20]
      %99 = sst [smem:[#allocation10]] [#allocation19]
    $region25: #{tpu_custom_call.1} parent=1 // pred_fallthru
      _
    %101 = shalt.err (0)
    %s103 = sshll.u32 %s95, 4
    %s104 = int_to_ptr.vmem [resolvable:$true] %s103
    %106 = dma.hbm_to_vmem [thread:$0]  %s94, 16, %s104, [#allocation2]
    %s107 = sadd.s32 %s12, 6
    %s108 = sld [smem:[#allocation4 + %s107]]
    %s109 = smul.addr %s108, 16
    %s110 = scalar_lea.hbm %s1, %s109
    %s111 = scalar_lea.vmem [#allocation5], 6
    // Predicated region
    $region26: #{tpu_custom_call.1} parent=1 // pred_check
      _
    $region27: #{tpu_custom_call.1} parent=1 // pred_check_branch
      %113 = sbr.rel target = $region29
    $region28: #{tpu_custom_call.1} parent=1 // pred_region
      %114 = sst [smem:[#allocation9]] [#allocation22]
      %115 = sst [smem:[#allocation10]] [#allocation21]
    $region29: #{tpu_custom_call.1} parent=1 // pred_fallthru
      _
    %117 = shalt.err (0)
    %s119 = sshll.u32 %s111, 4
    %s120 = int_to_ptr.vmem [resolvable:$true] %s119
    %122 = dma.hbm_to_vmem [thread:$0]  %s110, 16, %s120, [#allocation2]
    %s123 = sadd.s32 %s12, 7
    %s124 = sld [smem:[#allocation4 + %s123]]
    %s125 = smul.addr %s124, 16
    %s126 = scalar_lea.hbm %s1, %s125
    %s127 = scalar_lea.vmem [#allocation5], 7
    // Predicated region
    $region30: #{tpu_custom_call.1} parent=1 // pred_check
      _
    $region31: #{tpu_custom_call.1} parent=1 // pred_check_branch
      %129 = sbr.rel target = $region33
    $region32: #{tpu_custom_call.1} parent=1 // pred_region
      %130 = sst [smem:[#allocation9]] [#allocation24]
      %131 = sst [smem:[#allocation10]] [#allocation23]
    $region33: #{tpu_custom_call.1} parent=1 // pred_fallthru
      _
    %133 = shalt.err (0)
    %s135 = sshll.u32 %s127, 4
    %s136 = int_to_ptr.vmem [resolvable:$true] %s135
    %138 = dma.hbm_to_vmem [thread:$0]  %s126, 16, %s136, [#allocation2]
    %s139 = sadd.s32 %s12, 8
    %s140 = sld [smem:[#allocation4 + %s139]]
    %s141 = smul.addr %s140, 16
    %s142 = scalar_lea.hbm %s1, %s141
    %s143 = scalar_lea.vmem [#allocation5], 8
    // Predicated region
    $region34: #{tpu_custom_call.1} parent=1 // pred_check
      _
    $region35: #{tpu_custom_call.1} parent=1 // pred_check_branch
      %145 = sbr.rel target = $region37
    $region36: #{tpu_custom_call.1} parent=1 // pred_region
      %146 = sst [smem:[#allocation9]] [#allocation26]
      %147 = sst [smem:[#allocation10]] [#allocation25]
    $region37: #{tpu_custom_call.1} parent=1 // pred_fallthru
      _
    %149 = shalt.err (0)
    %s151 = sshll.u32 %s143, 4
    %s152 = int_to_ptr.vmem [resolvable:$true] %s151
    %154 = dma.hbm_to_vmem [thread:$0]  %s142, 16, %s152, [#allocation2]
    %s155 = sadd.s32 %s12, 9
    %s156 = sld [smem:[#allocation4 + %s155]]
    %s157 = smul.addr %s156, 16
    %s158 = scalar_lea.hbm %s1, %s157
    %s159 = scalar_lea.vmem [#allocation5], 9
    // Predicated region
    $region38: #{tpu_custom_call.1} parent=1 // pred_check
      _
    $region39: #{tpu_custom_call.1} parent=1 // pred_check_branch
      %161 = sbr.rel target = $region41
    $region40: #{tpu_custom_call.1} parent=1 // pred_region
      %162 = sst [smem:[#allocation9]] [#allocation28]
      %163 = sst [smem:[#allocation10]] [#allocation27]
    $region41: #{tpu_custom_call.1} parent=1 // pred_fallthru
      _
    %165 = shalt.err (0)
    %s167 = sshll.u32 %s159, 4
    %s168 = int_to_ptr.vmem [resolvable:$true] %s167
    %170 = dma.hbm_to_vmem [thread:$0]  %s158, 16, %s168, [#allocation2]
    %s171 = sadd.s32 %s12, 10
    %s172 = sld [smem:[#allocation4 + %s171]]
    %s173 = smul.addr %s172, 16
    %s174 = scalar_lea.hbm %s1, %s173
    %s175 = scalar_lea.vmem [#allocation5], 10
    // Predicated region
    $region42: #{tpu_custom_call.1} parent=1 // pred_check
      _
    $region43: #{tpu_custom_call.1} parent=1 // pred_check_branch
      %177 = sbr.rel target = $region45
    $region44: #{tpu_custom_call.1} parent=1 // pred_region
      %178 = sst [smem:[#allocation9]] [#allocation30]
      %179 = sst [smem:[#allocation10]] [#allocation29]
    $region45: #{tpu_custom_call.1} parent=1 // pred_fallthru
      _
    %181 = shalt.err (0)
    %s183 = sshll.u32 %s175, 4
    %s184 = int_to_ptr.vmem [resolvable:$true] %s183
    %186 = dma.hbm_to_vmem [thread:$0]  %s174, 16, %s184, [#allocation2]
    %s187 = sadd.s32 %s12, 11
    %s188 = sld [smem:[#allocation4 + %s187]]
    %s189 = smul.addr %s188, 16
    %s190 = scalar_lea.hbm %s1, %s189
    %s191 = scalar_lea.vmem [#allocation5], 11
    // Predicated region
    $region46: #{tpu_custom_call.1} parent=1 // pred_check
      _
    $region47: #{tpu_custom_call.1} parent=1 // pred_check_branch
      %193 = sbr.rel target = $region49
    $region48: #{tpu_custom_call.1} parent=1 // pred_region
      %194 = sst [smem:[#allocation9]] [#allocation32]
      %195 = sst [smem:[#allocation10]] [#allocation31]
    $region49: #{tpu_custom_call.1} parent=1 // pred_fallthru
      _
    %197 = shalt.err (0)
    %s199 = sshll.u32 %s191, 4
    %s200 = int_to_ptr.vmem [resolvable:$true] %s199
    %202 = dma.hbm_to_vmem [thread:$0]  %s190, 16, %s200, [#allocation2]
    %s203 = sadd.s32 %s12, 12
    %s204 = sld [smem:[#allocation4 + %s203]]
    %s205 = smul.addr %s204, 16
    %s206 = scalar_lea.hbm %s1, %s205
    %s207 = scalar_lea.vmem [#allocation5], 12
    // Predicated region
    $region50: #{tpu_custom_call.1} parent=1 // pred_check
      _
    $region51: #{tpu_custom_call.1} parent=1 // pred_check_branch
      %209 = sbr.rel target = $region53
    $region52: #{tpu_custom_call.1} parent=1 // pred_region
      %210 = sst [smem:[#allocation9]] [#allocation34]
      %211 = sst [smem:[#allocation10]] [#allocation33]
    $region53: #{tpu_custom_call.1} parent=1 // pred_fallthru
      _
    %213 = shalt.err (0)
    %s215 = sshll.u32 %s207, 4
    %s216 = int_to_ptr.vmem [resolvable:$true] %s215
    %218 = dma.hbm_to_vmem [thread:$0]  %s206, 16, %s216, [#allocation2]
    %s219 = sadd.s32 %s12, 13
    %s220 = sld [smem:[#allocation4 + %s219]]
    %s221 = smul.addr %s220, 16
    %s222 = scalar_lea.hbm %s1, %s221
    %s223 = scalar_lea.vmem [#allocation5], 13
    // Predicated region
    $region54: #{tpu_custom_call.1} parent=1 // pred_check
      _
    $region55: #{tpu_custom_call.1} parent=1 // pred_check_branch
      %225 = sbr.rel target = $region57
    $region56: #{tpu_custom_call.1} parent=1 // pred_region
      %226 = sst [smem:[#allocation9]] [#allocation36]
      %227 = sst [smem:[#allocation10]] [#allocation35]
    $region57: #{tpu_custom_call.1} parent=1 // pred_fallthru
      _
    %229 = shalt.err (0)
    %s231 = sshll.u32 %s223, 4
    %s232 = int_to_ptr.vmem [resolvable:$true] %s231
    %234 = dma.hbm_to_vmem [thread:$0]  %s222, 16, %s232, [#allocation2]
    %s235 = sadd.s32 %s12, 14
    %s236 = sld [smem:[#allocation4 + %s235]]
    %s237 = smul.addr %s236, 16
    %s238 = scalar_lea.hbm %s1, %s237
    %s239 = scalar_lea.vmem [#allocation5], 14
    // Predicated region
    $region58: #{tpu_custom_call.1} parent=1 // pred_check
      _
    $region59: #{tpu_custom_call.1} parent=1 // pred_check_branch
      %241 = sbr.rel target = $region61
    $region60: #{tpu_custom_call.1} parent=1 // pred_region
      %242 = sst [smem:[#allocation9]] [#allocation38]
      %243 = sst [smem:[#allocation10]] [#allocation37]
    $region61: #{tpu_custom_call.1} parent=1 // pred_fallthru
      _
    %245 = shalt.err (0)
    %s247 = sshll.u32 %s239, 4
    %s248 = int_to_ptr.vmem [resolvable:$true] %s247
    %250 = dma.hbm_to_vmem [thread:$0]  %s238, 16, %s248, [#allocation2]
    %s251 = sadd.s32 %s12, 15
    %s252 = sld [smem:[#allocation4 + %s251]]
    %s253 = smul.addr %s252, 16
    %s254 = scalar_lea.hbm %s1, %s253
    %s255 = scalar_lea.vmem [#allocation5], 15
    // Predicated region
    $region62: #{tpu_custom_call.1} parent=1 // pred_check
      _
    $region63: #{tpu_custom_call.1} parent=1 // pred_check_branch
      %257 = sbr.rel target = $region65
    $region64: #{tpu_custom_call.1} parent=1 // pred_region
      %258 = sst [smem:[#allocation9]] [#allocation40]
      %259 = sst [smem:[#allocation10]] [#allocation39]
    $region65: #{tpu_custom_call.1} parent=1 // pred_fallthru
      _
    %261 = shalt.err (0)
    %s263 = sshll.u32 %s255, 4
    %s264 = int_to_ptr.vmem [resolvable:$true] %s263
    %266 = dma.hbm_to_vmem [thread:$0]  %s254, 16, %s264, [#allocation2]
    %s267 = smul.u32 16, 1
    %s268 = sshll.u32 %s267, 4
    %269 = dma.done [#allocation2], %s268
    // Predicated region
    $region66: #{tpu_custom_call.1} parent=1 // pred_check
      _
    $region67: #{tpu_custom_call.1} parent=1 // pred_check_branch
      %271 = sbr.rel (0) target = $region69
    $region68: #{tpu_custom_call.1} parent=1 // pred_region
      %s273 = ssub.s32 256, 256
      %274 = vsyncadd [#allocation6], %s273
      %s275 = sshll.u32 [#allocation5], 4
      %s276 = int_to_ptr.vmem [resolvable:$true] %s275
      %281 = dma.vmem_to_hbm [thread:$0]  %s276, 256, %s2, [#allocation6], 128, 128, 8
    $region69: #{tpu_custom_call.1} parent=1 // pred_fallthru
      _
    // Predicated region
    $region70: #{tpu_custom_call.1} parent=1 // pred_check
      _
    $region71: #{tpu_custom_call.1} parent=1 // pred_check_branch
      %283 = sbr.rel (0) target = $region73
    $region72: #{tpu_custom_call.1} parent=1 // pred_region
      %284 = dma.done [#allocation6], 256
    $region73: #{tpu_custom_call.1} parent=1 // pred_fallthru
      _
    %285 = vsyncpa [#allocation6], 1
  %286 = vsyncmov [#allocation2]
  %s287 = vpop.sfrf %286
  %p288 = scmp.eq.s32.totalorder %s287, 0
  %p289 = pneg %p288
  %291 = shalt.err (%p289)

</llo_original>
